<compile_context>
chip_gen: v7x
topology: tpu7x:2x2x1
jax: 0.10.0
libtpu: 0.0.40
codegen_flags: <defaults>
</compile_context>

<pallas_src>
import functools

import jax
import jax.numpy as jnp
from jax import lax
from jax.experimental import pallas as pl
from jax.experimental.pallas import tpu as pltpu


# ----------------------------- linear kernel -----------------------------
def _linear_kernel(x_ref, w_ref, b_ref, o_ref, *, scale):
    # x: (tm, Ein), w: (Ein, Eout), b: (1, Eout)  -> o: (tm, Eout)
    x = x_ref[...].astype(jnp.bfloat16)
    w = w_ref[...].astype(jnp.bfloat16)
    acc = jnp.dot(x, w, preferred_element_type=jnp.float32) + b_ref[...]
    if scale != 1.0:
        acc = acc * scale          # fused q-scaling (static constant)
    o_ref[...] = acc.astype(o_ref.dtype)


def linear(x, w, b, *, scale=1.0, tile_m=512):
    """(M, Ein) @ (Ein, Eout) + (Eout,) -> (M, Eout), row-tiled and pipelined."""
    M, Ein = x.shape
    Eout = w.shape[1]
    tm = min(M, tile_m)
    return pl.pallas_call(
        functools.partial(_linear_kernel, scale=float(scale)),
        out_shape=jax.ShapeDtypeStruct((M, Eout), jnp.float32),
        grid=(pl.cdiv(M, tm),),
        in_specs=[
            pl.BlockSpec((tm, Ein), lambda i: (i, 0)),
            pl.BlockSpec((Ein, Eout), lambda i: (0, 0)),   # weights stay resident
            pl.BlockSpec((1, Eout), lambda i: (0, 0)),
        ],
        out_specs=pl.BlockSpec((tm, Eout), lambda i: (i, 0)),
        compiler_params=pltpu.CompilerParams(
            dimension_semantics=("parallel",),
            vmem_limit_bytes=64 * 1024 * 1024,
        ),
    )(x, w, b.reshape(1, Eout))


# ------------------------ gaussian kernel attention -----------------------
def _kernel_attn_kernel(q_ref, k_ref, v_ref, o_ref, p_ref, *,
                        num_heads, head_dim, neg_inv_two_sigma2):
    # q_ref: (1, tq, E), k_ref/v_ref: (1, S, E)
    # o_ref: (1, tq, E), p_ref: (1, H, tq, S)
    H, D = num_heads, head_dim
    for h in range(H):                       # static loop: head slices are free views
        lo, hi = h * D, (h + 1) * D
        q_h = q_ref[0, :, lo:hi]             # (tq, D)  (already scaled by D**-0.5)
        k_h = k_ref[0, :, lo:hi]             # (S, D)
        v_h = v_ref[0, :, lo:hi]             # (S, D)

        # ||q - k||^2 = |q|^2 + |k|^2 - 2 q.k ; q.k on the MXU (bf16 in, f32 acc),
        # contraction over the last dims so no (S,D)->(D,S) transpose materializes.
        qk = lax.dot_general(
            q_h.astype(jnp.bfloat16), k_h.astype(jnp.bfloat16),
            dimension_numbers=(((1,), (1,)), ((), ())),
            preferred_element_type=jnp.float32)                     # (tq, S)
        q2 = jnp.sum(q_h * q_h, axis=-1, keepdims=True)             # (tq, 1)
        k2 = jnp.sum(k_h * k_h, axis=-1, keepdims=True).T           # (1, S) small XLU op
        d2 = jnp.maximum(q2 + k2 - 2.0 * qk, 0.0)

        # Subtract per-row min (cancels in normalization) -> no all-zero rows.
        d2 = d2 - jnp.min(d2, axis=-1, keepdims=True)
        e = jnp.exp(d2 * neg_inv_two_sigma2)                        # (tq, S), row max == 1
        inv = pl.reciprocal(jnp.sum(e, axis=-1, keepdims=True), approx=True)
        probs = e * inv

        p_ref[0, h] = probs.astype(p_ref.dtype)
        out_h = jnp.dot(probs.astype(jnp.bfloat16), v_h.astype(jnp.bfloat16),
                        preferred_element_type=jnp.float32)         # (tq, D)
        # Static column-slice store into the merged lane-dense (tq, E) block.
        o_ref[0, :, lo:hi] = out_h.astype(o_ref.dtype)


def kernel_attention(q, k, v, params, *, num_heads, sigma=1.0,
                     tile_q=256, probs_dtype=jnp.float32):
    """Pallas implementation of KernelAttention.forward (no mask, no dropout).

    probs_dtype can be set to jnp.bfloat16 to halve the dominant (B,H,T,S)
    HBM writeback when exact-f32 probabilities are not required.
    """
    B, T, E = q.shape
    S = k.shape[1]
    H = num_heads
    D = E // H
    scaling = float(D) ** -0.5

    # Projections (row-tiled Pallas matmuls; q scaling fused into the kernel).
    qp = linear(q.reshape(B * T, E), params["wq"], params["bq"], scale=scaling)
    kp = linear(k.reshape(B * S, E), params["wk"], params["bk"])
    vp = linear(v.reshape(B * S, E), params["wv"], params["bv"])

    # Free reshapes only — the head split/merge happens *inside* the kernel via
    # static column slices, so there are no HBM transpose passes.
    qh = qp.reshape(B, T, E)
    kh = kp.reshape(B, S, E)
    vh = vp.reshape(B, S, E)

    tq = min(T, tile_q)

    attn, probs = pl.pallas_call(
        functools.partial(
            _kernel_attn_kernel,
            num_heads=H, head_dim=D,
            neg_inv_two_sigma2=-1.0 / (2.0 * float(sigma) * float(sigma))),
        out_shape=(
            jax.ShapeDtypeStruct((B, T, E), jnp.float32),
            jax.ShapeDtypeStruct((B, H, T, S), probs_dtype),
        ),
        grid=(B, pl.cdiv(T, tq)),
        in_specs=[
            pl.BlockSpec((1, tq, E), lambda b, t: (b, t, 0)),
            pl.BlockSpec((1, S, E), lambda b, t: (b, 0, 0)),
            pl.BlockSpec((1, S, E), lambda b, t: (b, 0, 0)),
        ],
        out_specs=(
            pl.BlockSpec((1, tq, E), lambda b, t: (b, t, 0)),
            pl.BlockSpec((1, H, tq, S), lambda b, t: (b, 0, t, 0)),
        ),
        compiler_params=pltpu.CompilerParams(
            dimension_semantics=("parallel", "parallel"),
            vmem_limit_bytes=64 * 1024 * 1024,
        ),
    )(qh, kh, vh)

    # Output projection on the merged (B*T, E) slab.
    out = linear(attn.reshape(B * T, E), params["wo"], params["bo"]).reshape(B, T, E)
    return out, probs


# --------------------------------- main -----------------------------------
if __name__ == "__main__":
    B, T, E, H = 2, 8, 32, 4  # batch=2, seq=8, embed_dim=32, num_heads=4
    sigma = 1.0

    key = jax.random.PRNGKey(0)
    ks = jax.random.split(key, 11)
    q = jax.random.normal(ks[0], (B, T, E), jnp.float32)
    k = jax.random.normal(ks[1], (B, T, E), jnp.float32)
    v = jax.random.normal(ks[2], (B, T, E), jnp.float32)

    wscale = 1.0 / jnp.sqrt(jnp.float32(E))
    params = {
        "wq": jax.random.normal(ks[3], (E, E), jnp.float32) * wscale,
        "bq": jax.random.normal(ks[4], (E,), jnp.float32) * 0.1,
        "wk": jax.random.normal(ks[5], (E, E), jnp.float32) * wscale,
        "bk": jax.random.normal(ks[6], (E,), jnp.float32) * 0.1,
        "wv": jax.random.normal(ks[7], (E, E), jnp.float32) * wscale,
        "bv": jax.random.normal(ks[8], (E,), jnp.float32) * 0.1,
        "wo": jax.random.normal(ks[9], (E, E), jnp.float32) * wscale,
        "bo": jax.random.normal(ks[10], (E,), jnp.float32) * 0.1,
    }

    out, kernel_attn = kernel_attention(q, k, v, params, num_heads=H, sigma=sigma)
    jax.block_until_ready((out, kernel_attn))

    assert out.shape == (B, T, E)
    assert kernel_attn.shape == (B, H, T, T)
    assert bool(jnp.all(jnp.isfinite(out))) and bool(jnp.all(jnp.isfinite(kernel_attn)))
    print("KERNEL_OK")
</pallas_src>

<mosaic_0001>
module attributes {stable_mosaic.version = 11 : i64} {
  func.func @_linear_kernel(%arg0: i32, %arg1: memref<16x32xf32, #tpu.memory_space<vmem>>, %arg2: memref<32x32xf32, #tpu.memory_space<vmem>>, %arg3: memref<1x32xf32, #tpu.memory_space<vmem>>, %arg4: memref<16x32xf32, #tpu.memory_space<vmem>>) attributes {dimension_semantics = [#tpu.dimension_semantics<parallel>], iteration_bounds = array<i64: 1>, scalar_prefetch = 0 : i64, scratch_operands = 0 : i64, tpu.core_type = #tpu.core_type<tc>, window_params = [{transform_indices = @transform_0, window_bounds = array<i64: 16, 32>}, {pipeline_mode = #tpu.pipeline_mode<synchronous>, transform_indices = @transform_1, window_bounds = array<i64: 32, 32>}, {pipeline_mode = #tpu.pipeline_mode<synchronous>, transform_indices = @transform_2, window_bounds = array<i64: 1, 32>}, {transform_indices = @transform_3, window_bounds = array<i64: 16, 32>}]} {
    %c0 = arith.constant 0 : index
    %c0_0 = arith.constant 0 : index
    %0 = vector.load %arg1[%c0, %c0_0] : memref<16x32xf32, #tpu.memory_space<vmem>>, vector<16x32xf32>
    %1 = arith.truncf %0 : vector<16x32xf32> to vector<16x32xbf16>
    %c0_1 = arith.constant 0 : index
    %c0_2 = arith.constant 0 : index
    %2 = vector.load %arg2[%c0_1, %c0_2] : memref<32x32xf32, #tpu.memory_space<vmem>>, vector<32x32xf32>
    %3 = arith.truncf %2 : vector<32x32xf32> to vector<32x32xbf16>
    %cst = arith.constant dense<0.000000e+00> : vector<16x32xf32>
    %4 = tpu.matmul %1, %3, %cst {dimension_numbers = #tpu.dot_dimension_numbers<[1], [0], [0], [1], [0, 0, 1, 1], [], []>} : vector<16x32xbf16>, vector<32x32xbf16>, vector<16x32xf32> -> vector<16x32xf32>
    %c0_3 = arith.constant 0 : index
    %c0_4 = arith.constant 0 : index
    %5 = vector.load %arg3[%c0_3, %c0_4] : memref<1x32xf32, #tpu.memory_space<vmem>>, vector<1x32xf32>
    %6 = vector.broadcast %5 : vector<1x32xf32> to vector<16x32xf32>
    %7 = arith.addf %4, %6 : vector<16x32xf32>
    %cst_5 = arith.constant 0.353553385 : f32
    %8 = vector.broadcast %cst_5 : f32 to vector<16x32xf32>
    %9 = arith.mulf %7, %8 : vector<16x32xf32>
    %c0_6 = arith.constant 0 : index
    %c0_7 = arith.constant 0 : index
    %10 = vector.load %arg4[%c0_6, %c0_7] : memref<16x32xf32, #tpu.memory_space<vmem>>, vector<16x32xf32>
    tpu.vector_store %arg4[%c0_6, %c0_7], %9 {strides = array<i32>} : memref<16x32xf32, #tpu.memory_space<vmem>>, vector<16x32xf32>,
    return
  }
  func.func @transform_0(%arg0: i32) -> (i32, i32) {
    %c0_i32 = arith.constant 0 : i32
    %c0_i32_0 = arith.constant 0 : i32
    return %arg0, %c0_i32 : i32, i32
  }
  func.func @transform_1(%arg0: i32) -> (i32, i32) {
    %c0_i32 = arith.constant 0 : i32
    %c0_i32_0 = arith.constant 0 : i32
    %c0_i32_1 = arith.constant 0 : i32
    return %c0_i32, %c0_i32_0 : i32, i32
  }
  func.func @transform_2(%arg0: i32) -> (i32, i32) {
    %c0_i32 = arith.constant 0 : i32
    %c0_i32_0 = arith.constant 0 : i32
    %c0_i32_1 = arith.constant 0 : i32
    return %c0_i32, %c0_i32_0 : i32, i32
  }
  func.func @transform_3(%arg0: i32) -> (i32, i32) {
    %c0_i32 = arith.constant 0 : i32
    %c0_i32_0 = arith.constant 0 : i32
    return %arg0, %c0_i32 : i32, i32
  }
}

</mosaic_0001>

<llo_original>
// kernel: tpu_custom_call.1
$region0: #{tpu_custom_call.1}
  #allocation0 [shape = 'u32[]', space=smem, size = 0x4, offset = 0x4, fixed_abs, tag = 'smem constant byte address 0x4 - core index']
  #allocation1 [shape = 'u32[144,128]{1,0:T(1,128)}', space=vmem, size = 0x12000, scoped, tag = 'internal scratch']
  %s0 = inlined_call_operand.hbm [shape: f32[16,32], index: 0, kind: input, shape index: {}]
  %s1 = inlined_call_operand.hbm [shape: f32[32,32], index: 1, kind: input, shape index: {}]
  %s2 = inlined_call_operand.hbm [shape: f32[1,32], index: 2, kind: input, shape index: {}]
  %s3 = inlined_call_operand.hbm [shape: f32[16,32], index: 3, kind: output, shape index: {}]
  %s4 = sld [smem:[#allocation0]]
  $region34: #{tpu_custom_call.1} parent=0
    _
  %s6 = ssub.s32 1, %s4
  %s7 = scalar_select 0, %s6, %s4
  $region1: #{tpu_custom_call.1} parent=0
    #allocation2 [shape = 'u8[8192]{0}', space=vmem, size = 0x2000, scoped, tag = 'input window, operand 0, single buffered']
    #allocation3 [shape = 's32[1]{0}', space=sflag, size = 0x4, scoped, tag = 'scoped memory for tpu_custom_call.1']
    #allocation4 [shape = 's32[1]{0}', space=sflag, size = 0x4, scoped, tag = 'scoped memory for tpu_custom_call.1']
    #allocation5 [shape = 'u8[16384]{0}', space=vmem, size = 0x4000, scoped, tag = 'input window, operand 1, single buffered']
    #allocation6 [shape = 's32[1]{0}', space=sflag, size = 0x4, scoped, tag = 'scoped memory for tpu_custom_call.1']
    #allocation7 [shape = 'u8[512]{0}', space=vmem, size = 0x400, scoped, tag = 'input window, operand 2, single buffered']
    #allocation8 [shape = 'u8[8192]{0}', space=vmem, size = 0x2000, scoped, tag = 'output window, operand 0, single buffered']
    %8 = vsyncpa [#allocation3], 0
    %9 = vsyncpa [#allocation6], 0
    %10 = vsyncpa [#allocation4], 0
    // Predicated region
    $region2: #{tpu_custom_call.1} parent=1 // pred_check
      _
    $region3: #{tpu_custom_call.1} parent=1 // pred_check_branch
      %12 = sbr.rel (0) target = $region5
    $region4: #{tpu_custom_call.1} parent=1 // pred_region
      %s14 = ssub.s32 256, 256
      %15 = vsyncadd [#allocation3], %s14
      %s16 = sshll.u32 [#allocation2], 4
      %s17 = int_to_ptr.vmem [resolvable:$true] %s16
      %22 = dma.hbm_to_vmem [thread:$0]  %s0, 256, %s17, [#allocation3], 128, 128, 8
    $region5: #{tpu_custom_call.1} parent=1 // pred_fallthru
      _
    // Predicated region
    $region6: #{tpu_custom_call.1} parent=1 // pred_check
      _
    $region7: #{tpu_custom_call.1} parent=1 // pred_check_branch
      %24 = sbr.rel (0) target = $region9
    $region8: #{tpu_custom_call.1} parent=1 // pred_region
      %s26 = ssub.s32 512, 512
      %27 = vsyncadd [#allocation6], %s26
      %s28 = sshll.u32 [#allocation5], 4
      %s29 = int_to_ptr.vmem [resolvable:$true] %s28
      %34 = dma.hbm_to_vmem [thread:$0]  %s1, 512, %s29, [#allocation6], 128, 128, 8
    $region9: #{tpu_custom_call.1} parent=1 // pred_fallthru
      _
    // Predicated region
    $region10: #{tpu_custom_call.1} parent=1 // pred_check
      _
    $region11: #{tpu_custom_call.1} parent=1 // pred_check_branch
      %36 = sbr.rel (0) target = $region13
    $region12: #{tpu_custom_call.1} parent=1 // pred_region
      %s38 = ssub.s32 16, 16
      %39 = vsyncadd [#allocation6], %s38
      %s41 = sshll.u32 [#allocation7], 4
      %s42 = int_to_ptr.vmem [resolvable:$true] %s41
      %44 = dma.hbm_to_vmem [thread:$0]  %s2, 16, %s42, [#allocation6]
    $region13: #{tpu_custom_call.1} parent=1 // pred_fallthru
      _
    // Predicated region
    $region14: #{tpu_custom_call.1} parent=1 // pred_check
      _
    $region15: #{tpu_custom_call.1} parent=1 // pred_check_branch
      %46 = sbr.rel (0) target = $region17
    $region16: #{tpu_custom_call.1} parent=1 // pred_region
      %47 = dma.done [#allocation3], 256
    $region17: #{tpu_custom_call.1} parent=1 // pred_fallthru
      _
    // Predicated region
    $region18: #{tpu_custom_call.1} parent=1 // pred_check
      _
    $region19: #{tpu_custom_call.1} parent=1 // pred_check_branch
      %49 = sbr.rel (0) target = $region21
    $region20: #{tpu_custom_call.1} parent=1 // pred_region
      %50 = dma.done [#allocation6], 512
    $region21: #{tpu_custom_call.1} parent=1 // pred_fallthru
      _
    // Predicated region
    $region22: #{tpu_custom_call.1} parent=1 // pred_check
      _
    $region23: #{tpu_custom_call.1} parent=1 // pred_check_branch
      %52 = sbr.rel (0) target = $region25
    $region24: #{tpu_custom_call.1} parent=1 // pred_region
      %53 = dma.done [#allocation6], 16
    $region25: #{tpu_custom_call.1} parent=1 // pred_fallthru
      _
    %v55 = vld [vmem:[#allocation2] sm:$0xff]
    %v56 = vld [vmem:[#allocation2 + $0x8] sm:$0xff]
    %v57 = vpack.c.bf16 %v56, %v55
    %v58 = vld [vmem:[#allocation5] sm:$0xff]
    %v59 = vld [vmem:[#allocation5 + $0x8] sm:$0xff]
    %v60 = vld [vmem:[#allocation5 + $0x10] sm:$0xff]
    %v61 = vld [vmem:[#allocation5 + $0x18] sm:$0xff]
    %v62 = vpack.c.bf16 %v59, %v58
    %v63 = vpack.c.bf16 %v61, %v60
    %v64 = vld [vmem:[#allocation7] sm:$0x1]
    %v66 = vlaneseq
    %v67 = vshrl.u32 %v66, 7
    %v68 = vsub.s32 0, %v67
    %v69 = vrot.slane %v64, %v68
    %vm71 = vcmask 261120
    %v73 = vsel %vm71, %v57, 0
    %75 = vmatprep.subr.bf16.mxu0 0
    %76 = vmatpush1.bf16.msra.mxu0 %v62
    %77 = vmatprep.subr.bf16.mxu0 0
    %78 = vmatpush1.bf16.msra.mxu0 %v63
    %79 = vmatprep.subr.bf16.mxu0 0
    %80 = vmatpush1.bf16.msra.mxu0 0
    %81 = vmatprep.subr.bf16.mxu0 0
    %82 = vmatpush1.bf16.msra.mxu0 0
    %83 = vmatprep.subr.bf16.mxu0 0
    %84 = vmatpush1.bf16.msra.mxu0 0
    %85 = vmatprep.subr.bf16.mxu0 0
    %86 = vmatpush1.bf16.msra.mxu0 0
    %87 = vmatprep.subr.bf16.mxu0 0
    %88 = vmatpush1.bf16.msra.mxu0 0
    %89 = vmatprep.subr.bf16.mxu0 0
    %90 = vmatpush1.bf16.msra.mxu0 0
    %91 = vmatprep.subr.bf16.mxu0 0
    %92 = vmatpush1.bf16.msra.mxu0 0
    %93 = vmatprep.subr.bf16.mxu0 0
    %94 = vmatpush1.bf16.msra.mxu0 0
    %95 = vmatprep.subr.bf16.mxu0 0
    %96 = vmatpush1.bf16.msra.mxu0 0
    %97 = vmatprep.subr.bf16.mxu0 0
    %98 = vmatpush1.bf16.msra.mxu0 0
    %99 = vmatprep.subr.bf16.mxu0 0
    %100 = vmatpush1.bf16.msra.mxu0 0
    %101 = vmatprep.subr.bf16.mxu0 0
    %102 = vmatpush1.bf16.msra.mxu0 0
    %103 = vmatprep.subr.bf16.mxu0 0
    %104 = vmatpush1.bf16.msra.mxu0 0
    %105 = vmatprep.subr.bf16.mxu0 0
    %106 = vmatpush1.bf16.msra.mxu0 0
    %107 = vmatprep.mubr.bf16.mxu0 0
    %108 = vmatmul.mubr.bf16.gmra.mrb[0].mxu0 %v73
    %v109 = vpop.f32.mrb[0].mxu0
    %v110 = vadd.f32 %v69, %v109
    %v111 = vpop.f32.mrb[0].mxu0
    %v112 = vpop.f32.mrb[0].mxu0
    %v113 = vadd.f32 %v69, %v112
    %v114 = vpop.f32.mrb[0].mxu0
    %115 = vdwg.mxu0
    %v116 = vmul.f32 %v110, 0.35355338
    %v117 = vmul.f32 %v113, 0.35355338
    %118 = vst.msk [vmem:[#allocation8] sm:$0xff] %vm71, %v116
    %119 = vst.msk [vmem:[#allocation8 + $0x8] sm:$0xff] %vm71, %v117
    // Predicated region
    $region26: #{tpu_custom_call.1} parent=1 // pred_check
      _
    $region27: #{tpu_custom_call.1} parent=1 // pred_check_branch
      %121 = sbr.rel (0) target = $region29
    $region28: #{tpu_custom_call.1} parent=1 // pred_region
      %s123 = ssub.s32 256, 256
      %124 = vsyncadd [#allocation4], %s123
      %s125 = sshll.u32 [#allocation8], 4
      %s126 = int_to_ptr.vmem [resolvable:$true] %s125
      %131 = dma.vmem_to_hbm [thread:$0]  %s126, 256, %s3, [#allocation4], 128, 128, 8
    $region29: #{tpu_custom_call.1} parent=1 // pred_fallthru
      _
    // Predicated region
    $region30: #{tpu_custom_call.1} parent=1 // pred_check
      _
    $region31: #{tpu_custom_call.1} parent=1 // pred_check_branch
      %133 = sbr.rel (0) target = $region33
    $region32: #{tpu_custom_call.1} parent=1 // pred_region
      %134 = dma.done [#allocation4], 256
    $region33: #{tpu_custom_call.1} parent=1 // pred_fallthru
      _
    %135 = vsyncpa [#allocation3], 1
    %136 = vsyncpa [#allocation6], 1
    %137 = vsyncpa [#allocation4], 1

</llo_original>
